<compile_context>
chip_gen: v5e
topology: v5e:2x2
jax: 0.10.0
libtpu: 0.0.40
codegen_flags: <defaults>
</compile_context>

<pallas_src>
import functools

import jax
import jax.numpy as jnp
from jax import lax
from jax.experimental import pallas as pl
from jax.experimental.pallas import tpu as pltpu


def _drloss_kernel(*refs, n_total, tile_n, num_tiles, tiles_per_core, scale,
                   has_consts):
    if has_consts:
        feat_ref, target_ref, c_ref, invh_ref, out_ref, acc_ref = refs
    else:
        feat_ref, target_ref, out_ref, acc_ref = refs
        c_ref = invh_ref = None

    core = pl.program_id(0)      # reduction shard (2-way only on 2-TC chips)
    i = pl.program_id(1)         # tile index within this shard

    # Fresh accumulator at the start of each shard.
    @pl.when(i == 0)
    def _():
        acc_ref[...] = jnp.zeros_like(acc_ref)

    # Global tile index.  Unclamped: the masked branch below zeroes any rows of
    # the ragged final tile or the clamped even-split overhang.
    t = core * tiles_per_core + i

    # Hot path: per-row dot.  Elementwise multiply on the VPU (upcast fused in
    # so bf16 inputs work everywhere), lane reduction on the idle MXU instead
    # of the XLU (keeps the kernel DMA-bound on the 2-XLU v6e/v7x).
    prod = feat_ref[...].astype(jnp.float32) * target_ref[...].astype(jnp.float32)
    ones_col = jnp.ones((prod.shape[1], 1), jnp.float32)
    dot = jnp.dot(prod, ones_col, preferred_element_type=jnp.float32)  # (tile_n, 1)

    if has_consts:
        err = dot - c_ref[...]
        sq = err * err * invh_ref[...]
    else:
        err = dot - 1.0              # m_norm2 = h_norm2 = 1 specialization
        sq = err * err

    # Interior tiles: bare accumulate (no mask work).
    @pl.when(t < num_tiles - 1)
    def _():
        acc_ref[...] += sq

    # Ragged final tile / clamped overhang tiles: select (NOT multiply) so any
    # unspecified/NaN garbage in out-of-bounds rows is neutralized.
    @pl.when(t >= num_tiles - 1)
    def _():
        rows = t * tile_n + lax.broadcasted_iota(jnp.int32, (tile_n, 1), 0)
        acc_ref[...] += jnp.where(rows < n_total, sq, 0.0)

    # Finalize once per shard: single cross-row reduce + lane-dense block write.
    @pl.when(i == tiles_per_core - 1)
    def _():
        partial = jnp.sum(acc_ref[...]) * scale
        out_ref[...] = jnp.full(out_ref.shape, partial, dtype=jnp.float32)


def _vmem_plan():
    """(vmem_limit_bytes, tile_budget_bytes) derived from the actual chip."""
    cap = 128 * 1024 * 1024
    try:
        info = pltpu.get_tpu_info()
        cap = int(getattr(info, "vmem_capacity_bytes", cap))
    except Exception:
        pass
    # Leave headroom for Mosaic internal scratch, output block, temporaries.
    limit = min((cap * 3) // 4, 96 * 1024 * 1024)   # 96 MiB v5e/v6e, 48 MiB v7x
    budget = limit // 2                              # bytes the tile plan may use
    return int(limit), int(budget)


def _num_tensorcores():
    """2 only on 2-TensorCore-per-chip generations (v7x); 1 on v5e/v6e."""
    # TODO(synk): verify the "parallel" leading grid axis actually shards across
    # both v7x TensorCores; if not, switch that axis to pltpu.CORE_PARALLEL.
    try:
        kind = jax.devices()[0].device_kind.lower()
    except Exception:
        return 1
    return 2 if "v7" in kind else 1


def _pick_tile_n(n, d, in_itemsize, budget_bytes, has_consts):
    """Largest row-tile whose full double-buffered VMEM footprint fits budget."""
    d_pad = -(-d // 128) * 128                      # lane padding
    per_row = 2 * 2 * d_pad * in_itemsize           # feat+target, 2 bufs each
    per_row += 2 * d_pad * 4                        # f32 upcast/product temporaries
    per_row += 128 * 4                              # (tile_n,1) f32 acc (lane-padded)
    if has_consts:
        per_row += 2 * 2 * 128 * 4                  # c + inv_h blocks, 2 bufs each
    t = budget_bytes // per_row
    t = max(8, (t // 8) * 8)
    t = min(t, 8192)                                # sane ceiling (bytes-sized tiles)
    n_pad8 = -(-n // 8) * 8
    return int(min(t, n_pad8))


def dr_loss(feat, target, h_norm2=None, m_norm2=None, *, loss_weight=1.0,
            tile_n=None):
    """Pallas implementation of DRLoss.forward (reduction='mean')."""
    n, d = feat.shape
    assert target.shape == (n, d)
    has_consts = (h_norm2 is not None) or (m_norm2 is not None)

    vmem_limit, tile_budget = _vmem_plan()
    if tile_n is None:
        tile_n = _pick_tile_n(n, d, feat.dtype.itemsize, tile_budget, has_consts)
    assert tile_n % 8 == 0

    num_tiles = -(-n // tile_n)
    ncores = _num_tensorcores() if num_tiles >= 2 else 1
    tiles_per_core = -(-num_tiles // ncores)

    scale = 0.5 * float(loss_weight) / float(n)     # folds mean + loss_weight

    f32 = jnp.float32
    inputs = [feat, target]

    def data_map(c, i):
        # Clamp so the DMA block index stays in range; the in-kernel row mask
        # zeroes the duplicated rows of the clamped overhang tile.
        return (jnp.minimum(c * tiles_per_core + i, num_tiles - 1), 0)

    in_specs = [pl.BlockSpec((tile_n, d), data_map),
                pl.BlockSpec((tile_n, d), data_map)]

    if has_consts:
        # Per-row constants streamed as small (tile_n, 1) blocks alongside the
        # data tiles (no resident (N,1) arrays, no dynamic slicing in-kernel).
        h = jnp.ones((n,), f32) if h_norm2 is None else h_norm2.reshape(n).astype(f32)
        m = jnp.ones((n,), f32) if m_norm2 is None else m_norm2.reshape(n).astype(f32)
        c_arr = (m * h).reshape(n, 1)
        invh_arr = (1.0 / h).reshape(n, 1)   # inf for h==0, same as reference semantics
        inputs += [c_arr, invh_arr]
        in_specs += [pl.BlockSpec((tile_n, 1), data_map),
                     pl.BlockSpec((tile_n, 1), data_map)]

    kernel = functools.partial(
        _drloss_kernel, n_total=n, tile_n=tile_n, num_tiles=num_tiles,
        tiles_per_core=tiles_per_core, scale=scale, has_consts=has_consts)

    bytes_accessed = 2 * n * d * feat.dtype.itemsize
    if has_consts:
        bytes_accessed += 2 * n * 4
    bytes_accessed += ncores * 8 * 128 * 4
    cost = pl.CostEstimate(flops=2 * n * d, transcendentals=0,
                           bytes_accessed=int(bytes_accessed))

    out = pl.pallas_call(
        kernel,
        out_shape=jax.ShapeDtypeStruct((ncores, 8, 128), jnp.float32),
        grid_spec=pltpu.PrefetchScalarGridSpec(
            num_scalar_prefetch=0,
            grid=(ncores, tiles_per_core),
            in_specs=in_specs,
            out_specs=pl.BlockSpec((1, 8, 128), lambda c, i: (c, 0, 0)),
            scratch_shapes=[pltpu.VMEM((tile_n, 1), jnp.float32)],
        ),
        compiler_params=pltpu.CompilerParams(
            dimension_semantics=("parallel", "arbitrary"),
            vmem_limit_bytes=vmem_limit,
        ),
        cost_estimate=cost,
    )(*inputs)

    # One partial per shard (broadcast over its (8,128) block); sum them.
    return jnp.sum(out[:, 0, 0])


def dr_loss_ref(feat, target, h_norm2=None, m_norm2=None, *, loss_weight=1.0):
    dot = jnp.sum(feat.astype(jnp.float32) * target.astype(jnp.float32), axis=1)
    if h_norm2 is None:
        h_norm2 = jnp.ones_like(dot)
    if m_norm2 is None:
        m_norm2 = jnp.ones_like(dot)
    loss = 0.5 * jnp.mean((dot - m_norm2 * h_norm2) ** 2 / h_norm2)
    return loss * loss_weight


if __name__ == "__main__":
    key = jax.random.PRNGKey(0)
    k1, k2, k3, k4, k5, k6, k7, k8 = jax.random.split(key, 8)

    # Case 1: small batch, default h/m (the module's common path; specialized
    # kernel with no per-row constant inputs).
    N, D = 8, 32
    feat = jax.random.normal(k1, (N, D), jnp.float32)
    target = jax.random.normal(k2, (N, D), jnp.float32)
    loss = jax.block_until_ready(dr_loss(feat, target, loss_weight=1.0))
    ref = dr_loss_ref(feat, target, loss_weight=1.0)
    assert jnp.allclose(loss, ref, rtol=1e-5, atol=1e-5), (loss, ref)

    # Case 2: ragged N, explicit h/m, small tile_n to exercise the multi-tile
    # accumulator, the streamed constant blocks, the (gated) tail-row mask and
    # the clamped-overhang path on 2-TC chips.
    N2, D2 = 300, 32
    feat2 = jax.random.normal(k3, (N2, D2), jnp.float32)
    target2 = jax.random.normal(k4, (N2, D2), jnp.float32)
    h2 = jax.random.uniform(k5, (N2,), jnp.float32, 0.5, 1.5)
    m2 = jax.random.uniform(k6, (N2,), jnp.float32, 0.5, 1.5)
    loss2 = jax.block_until_ready(
        dr_loss(feat2, target2, h2, m2, loss_weight=2.0, tile_n=64))
    ref2 = dr_loss_ref(feat2, target2, h2, m2, loss_weight=2.0)
    assert jnp.allclose(loss2, ref2, rtol=1e-5, atol=1e-5), (loss2, ref2)

    # Case 3: bf16 inputs (fused upcast inside the kernel), default h/m.
    N3, D3 = 40, 32
    feat3 = jax.random.normal(k7, (N3, D3), jnp.float32).astype(jnp.bfloat16)
    target3 = jax.random.normal(k8, (N3, D3), jnp.float32).astype(jnp.bfloat16)
    loss3 = jax.block_until_ready(dr_loss(feat3, target3, loss_weight=1.0))
    ref3 = dr_loss_ref(feat3, target3, loss_weight=1.0)
    assert jnp.allclose(loss3, ref3, rtol=1e-3, atol=1e-3), (loss3, ref3)

    print("KERNEL_OK")
</pallas_src>

<mosaic_0001>
module attributes {stable_mosaic.version = 11 : i64} {
  func.func @_drloss_kernel(%arg0: i32, %arg1: i32, %arg2: memref<8x32xf32, #tpu.memory_space<vmem>>, %arg3: memref<8x32xf32, #tpu.memory_space<vmem>>, %arg4: memref<1x8x128xf32, #tpu.memory_space<vmem>>, %arg5: memref<8x1xf32, #tpu.memory_space<vmem>>) attributes {dimension_semantics = [#tpu.dimension_semantics<parallel>, #tpu.dimension_semantics<arbitrary>], iteration_bounds = array<i64: 1, 1>, scalar_prefetch = 0 : i64, scratch_operands = 1 : i64, tpu.core_type = #tpu.core_type<tc>, window_params = [{transform_indices = @transform_0, window_bounds = array<i64: 8, 32>}, {transform_indices = @transform_1, window_bounds = array<i64: 8, 32>}, {transform_indices = @transform_2, window_bounds = array<i64: 1, 8, 128>}]} {
    %c0_i32 = arith.constant 0 : i32
    %0 = arith.cmpi eq, %arg1, %c0_i32 : i32
    %1 = arith.extui %0 : i1 to i32
    %c0_i32_0 = arith.constant 0 : i32
    %2 = arith.cmpi ne, %1, %c0_i32_0 : i32
    scf.if %2 {
      %cst_12 = arith.constant 0.000000e+00 : f32
      %22 = vector.broadcast %cst_12 : f32 to vector<8x1xf32>
      %c0_13 = arith.constant 0 : index
      %c0_14 = arith.constant 0 : index
      %23 = vector.load %arg5[%c0_13, %c0_14] : memref<8x1xf32, #tpu.memory_space<vmem>>, vector<8x1xf32>
      tpu.vector_store %arg5[%c0_13, %c0_14], %22 {strides = array<i32>} : memref<8x1xf32, #tpu.memory_space<vmem>>, vector<8x1xf32>,
    } else {
    }
    %c1_i32 = arith.constant 1 : i32
    %3 = arith.muli %arg0, %c1_i32 : i32
    %4 = arith.addi %3, %arg1 : i32
    %c0 = arith.constant 0 : index
    %c0_1 = arith.constant 0 : index
    %5 = vector.load %arg2[%c0, %c0_1] : memref<8x32xf32, #tpu.memory_space<vmem>>, vector<8x32xf32>
    %c0_2 = arith.constant 0 : index
    %c0_3 = arith.constant 0 : index
    %6 = vector.load %arg3[%c0_2, %c0_3] : memref<8x32xf32, #tpu.memory_space<vmem>>, vector<8x32xf32>
    %7 = arith.mulf %5, %6 : vector<8x32xf32>
    %cst = arith.constant 1.000000e+00 : f32
    %8 = vector.broadcast %cst : f32 to vector<32x1xf32>
    %cst_4 = arith.constant dense<0.000000e+00> : vector<8x1xf32>
    %9 = tpu.matmul %7, %8, %cst_4 {dimension_numbers = #tpu.dot_dimension_numbers<[1], [0], [0], [1], [0, 0, 1, 1], [], []>} : vector<8x32xf32>, vector<32x1xf32>, vector<8x1xf32> -> vector<8x1xf32>
    %cst_5 = arith.constant 1.000000e+00 : f32
    %10 = vector.broadcast %cst_5 : f32 to vector<8x1xf32>
    %11 = arith.subf %9, %10 : vector<8x1xf32>
    %12 = arith.mulf %11, %11 : vector<8x1xf32>
    %c0_i32_6 = arith.constant 0 : i32
    %13 = arith.cmpi slt, %4, %c0_i32_6 : i32
    %14 = arith.extui %13 : i1 to i32
    %c0_i32_7 = arith.constant 0 : i32
    %15 = arith.cmpi ne, %14, %c0_i32_7 : i32
    scf.if %15 {
      %c0_12 = arith.constant 0 : index
      %c0_13 = arith.constant 0 : index
      %22 = vector.load %arg5[%c0_12, %c0_13] : memref<8x1xf32, #tpu.memory_space<vmem>>, vector<8x1xf32>
      %23 = arith.addf %22, %12 : vector<8x1xf32>
      %c0_14 = arith.constant 0 : index
      %c0_15 = arith.constant 0 : index
      %24 = vector.load %arg5[%c0_14, %c0_15] : memref<8x1xf32, #tpu.memory_space<vmem>>, vector<8x1xf32>
      tpu.vector_store %arg5[%c0_14, %c0_15], %23 {strides = array<i32>} : memref<8x1xf32, #tpu.memory_space<vmem>>, vector<8x1xf32>,
    } else {
    }
    %c0_i32_8 = arith.constant 0 : i32
    %16 = arith.cmpi sge, %4, %c0_i32_8 : i32
    %17 = arith.extui %16 : i1 to i32
    %c0_i32_9 = arith.constant 0 : i32
    %18 = arith.cmpi ne, %17, %c0_i32_9 : i32
    scf.if %18 {
      %c8_i32 = arith.constant 8 : i32
      %22 = arith.muli %4, %c8_i32 : i32
      %23 = tpu.iota {dimensions = array<i32: 0>} : vector<8x1xi32>
      %24 = vector.broadcast %22 : i32 to vector<8x1xi32>
      %25 = arith.addi %24, %23 : vector<8x1xi32>
      %c0_12 = arith.constant 0 : index
      %c0_13 = arith.constant 0 : index
      %26 = vector.load %arg5[%c0_12, %c0_13] : memref<8x1xf32, #tpu.memory_space<vmem>>, vector<8x1xf32>
      %c8_i32_14 = arith.constant 8 : i32
      %27 = vector.broadcast %c8_i32_14 : i32 to vector<8x1xi32>
      %28 = arith.cmpi slt, %25, %27 : vector<8x1xi32>
      %cst_15 = arith.constant 0.000000e+00 : f32
      %29 = vector.broadcast %cst_15 : f32 to vector<8x1xf32>
      %30 = arith.select %28, %12, %29 : vector<8x1xi1>, vector<8x1xf32>
      %31 = arith.addf %26, %30 : vector<8x1xf32>
      %c0_16 = arith.constant 0 : index
      %c0_17 = arith.constant 0 : index
      %32 = vector.load %arg5[%c0_16, %c0_17] : memref<8x1xf32, #tpu.memory_space<vmem>>, vector<8x1xf32>
      tpu.vector_store %arg5[%c0_16, %c0_17], %31 {strides = array<i32>} : memref<8x1xf32, #tpu.memory_space<vmem>>, vector<8x1xf32>,
    } else {
    }
    %c0_i32_10 = arith.constant 0 : i32
    %19 = arith.cmpi eq, %arg1, %c0_i32_10 : i32
    %20 = arith.extui %19 : i1 to i32
    %c0_i32_11 = arith.constant 0 : i32
    %21 = arith.cmpi ne, %20, %c0_i32_11 : i32
    scf.if %21 {
      %c0_12 = arith.constant 0 : index
      %c0_13 = arith.constant 0 : index
      %22 = vector.load %arg5[%c0_12, %c0_13] : memref<8x1xf32, #tpu.memory_space<vmem>>, vector<8x1xf32>
      %23 = vector.shape_cast %22 : vector<8x1xf32> to vector<1x8x1xf32>
      %cst_14 = arith.constant dense<0.000000e+00> : vector<1xf32>
      %24 = vector.multi_reduction <add>, %23, %cst_14 [1, 2] : vector<1x8x1xf32> to vector<1xf32>
      %25 = vector.shape_cast %24 : vector<1xf32> to vector<1x1x1xf32>
      %26 = vector.extract %25[0, 0, 0] : f32 from vector<1x1x1xf32>
      %cst_15 = arith.constant 6.250000e-02 : f32
      %27 = arith.mulf %26, %cst_15 : f32
      %28 = vector.broadcast %27 : f32 to vector<1x8x128xf32>
      %c0_16 = arith.constant 0 : index
      %c0_17 = arith.constant 0 : index
      %c0_18 = arith.constant 0 : index
      %29 = vector.load %arg4[%c0_16, %c0_17, %c0_18] : memref<1x8x128xf32, #tpu.memory_space<vmem>>, vector<1x8x128xf32>
      tpu.vector_store %arg4[%c0_16, %c0_17, %c0_18], %28 {strides = array<i32>} : memref<1x8x128xf32, #tpu.memory_space<vmem>>, vector<1x8x128xf32>,
    } else {
    }
    return
  }
  func.func @transform_0(%arg0: i32, %arg1: i32) -> (i32, i32) {
    %c1_i32 = arith.constant 1 : i32
    %0 = arith.muli %arg0, %c1_i32 : i32
    %1 = arith.addi %0, %arg1 : i32
    %c0_i32 = arith.constant 0 : i32
    %2 = arith.minsi %1, %c0_i32 : i32
    %c0_i32_0 = arith.constant 0 : i32
    %c0_i32_1 = arith.constant 0 : i32
    return %2, %c0_i32_0 : i32, i32
  }
  func.func @transform_1(%arg0: i32, %arg1: i32) -> (i32, i32) {
    %c1_i32 = arith.constant 1 : i32
    %0 = arith.muli %arg0, %c1_i32 : i32
    %1 = arith.addi %0, %arg1 : i32
    %c0_i32 = arith.constant 0 : i32
    %2 = arith.minsi %1, %c0_i32 : i32
    %c0_i32_0 = arith.constant 0 : i32
    %c0_i32_1 = arith.constant 0 : i32
    return %2, %c0_i32_0 : i32, i32
  }
  func.func @transform_2(%arg0: i32, %arg1: i32) -> (i32, i32, i32) {
    %c0_i32 = arith.constant 0 : i32
    %c0_i32_0 = arith.constant 0 : i32
    %c0_i32_1 = arith.constant 0 : i32
    return %arg0, %c0_i32, %c0_i32_0 : i32, i32, i32
  }
}

</mosaic_0001>

<llo_original>
// kernel: tpu_custom_call.1
$region0: #{tpu_custom_call.1}
  #allocation0 [shape = 'u32[]', space=smem, size = 0x4, offset = 0x4, fixed_abs, tag = 'smem constant byte address 0x4 - core index']
  #allocation1 [shape = 'u32[72,128]{1,0:T(1,128)}', space=vmem, size = 0x9000, scoped, tag = 'internal scratch']
  #allocation2 [shape = 'f32[8,1]{1,0:T(8,128)}', space=vmem, size = 0x1000, scoped, tag = 'scratch operand']
  %s0 = inlined_call_operand.hbm [shape: f32[8,32], index: 0, kind: input, shape index: {}]
  %s1 = inlined_call_operand.hbm [shape: f32[8,32], index: 1, kind: input, shape index: {}]
  %s2 = inlined_call_operand.hbm [shape: f32[1,8,128], index: 2, kind: output, shape index: {}]
  %s3 = sld [smem:[#allocation0]]
  $region42: #{tpu_custom_call.1} parent=0
    _
  %s5 = ssub.s32 1, %s3
  %s6 = scalar_select 0, %s5, %s3
  $region1: #{tpu_custom_call.1} parent=0
    #allocation3 [shape = 'u8[4096]{0}', space=vmem, size = 0x1000, scoped, tag = 'input window, operand 0, single buffered']
    #allocation4 [shape = 's32[1]{0}', space=sflag, size = 0x4, scoped, tag = 'scoped memory for tpu_custom_call.1']
    #allocation5 [shape = 's32[1]{0}', space=sflag, size = 0x4, scoped, tag = 'scoped memory for tpu_custom_call.1']
    #allocation6 [shape = 'u8[4096]{0}', space=vmem, size = 0x1000, scoped, tag = 'input window, operand 1, single buffered']
    #allocation7 [shape = 's32[1]{0}', space=sflag, size = 0x4, scoped, tag = 'scoped memory for tpu_custom_call.1']
    #allocation8 [shape = 'u8[4096]{0}', space=vmem, size = 0x1000, scoped, tag = 'output window, operand 0, single buffered']
    %7 = vsyncpa [#allocation4], 0
    %8 = vsyncpa [#allocation7], 0
    %9 = vsyncpa [#allocation5], 0
    // Predicated region
    $region2: #{tpu_custom_call.1} parent=1 // pred_check
      _
    $region3: #{tpu_custom_call.1} parent=1 // pred_check_branch
      %11 = sbr.rel (0) target = $region5
    $region4: #{tpu_custom_call.1} parent=1 // pred_region
      %s12 = sadd.s32 0, 0
      %p13 = scmp.lt.s32.totalorder %s12, 0
      %s14 = scalar_select %p13, %s12, 0
      %16 = vsyncadd [#allocation4], 0
      %s17 = smul.addr %s14, 8
      %s18 = scalar_lea.hbm %s0, %s17
      %s20 = sshll.u32 %s18, 4
      %s21 = int_to_ptr.hbm [resolvable:$true] %s20
      %s22 = sshll.u32 [#allocation3], 4
      %s23 = int_to_ptr.vmem [resolvable:$true] %s22
      %25 = dma.hbm_to_vmem [thread:$0]  %s21, 128, %s23, [#allocation4]
    $region5: #{tpu_custom_call.1} parent=1 // pred_fallthru
      _
    // Predicated region
    $region6: #{tpu_custom_call.1} parent=1 // pred_check
      _
    $region7: #{tpu_custom_call.1} parent=1 // pred_check_branch
      %27 = sbr.rel (0) target = $region9
    $region8: #{tpu_custom_call.1} parent=1 // pred_region
      %s28 = sadd.s32 0, 0
      %p29 = scmp.lt.s32.totalorder %s28, 0
      %s30 = scalar_select %p29, %s28, 0
      %32 = vsyncadd [#allocation7], 0
      %s33 = smul.addr %s30, 8
      %s34 = scalar_lea.hbm %s1, %s33
      %s36 = sshll.u32 %s34, 4
      %s37 = int_to_ptr.hbm [resolvable:$true] %s36
      %s38 = sshll.u32 [#allocation6], 4
      %s39 = int_to_ptr.vmem [resolvable:$true] %s38
      %41 = dma.hbm_to_vmem [thread:$0]  %s37, 128, %s39, [#allocation7]
    $region9: #{tpu_custom_call.1} parent=1 // pred_fallthru
      _
    // Predicated region
    $region10: #{tpu_custom_call.1} parent=1 // pred_check
      _
    $region11: #{tpu_custom_call.1} parent=1 // pred_check_branch
      %43 = sbr.rel (0) target = $region13
    $region12: #{tpu_custom_call.1} parent=1 // pred_region
      %45 = dma.done [#allocation4], 128
    $region13: #{tpu_custom_call.1} parent=1 // pred_fallthru
      _
    // Predicated region
    $region14: #{tpu_custom_call.1} parent=1 // pred_check
      _
    $region15: #{tpu_custom_call.1} parent=1 // pred_check_branch
      %47 = sbr.rel (0) target = $region17
    $region16: #{tpu_custom_call.1} parent=1 // pred_region
      %49 = dma.done [#allocation7], 128
    $region17: #{tpu_custom_call.1} parent=1 // pred_fallthru
      _
    %s50 = sadd.s32 0, 0
    %p51 = scmp.lt.s32.totalorder %s50, 0
    %s52 = scalar_select %p51, %s50, 0
    %s53 = sadd.s32 0, 0
    %p54 = scmp.lt.s32.totalorder %s53, 0
    %s55 = scalar_select %p54, %s53, 0
    %p56 = scmp.eq.s32.totalorder 0, 0
    // Predicated region
    $region18: #{tpu_custom_call.1} parent=1 // pred_check
      %p57 = pneg %p56
    $region19: #{tpu_custom_call.1} parent=1 // pred_check_branch
      %59 = sbr.rel (%p57) target = $region21
    $region20: #{tpu_custom_call.1} parent=1 // pred_region
      %vm60 = vcmask 7168
      %61 = vst.msk [vmem:[#allocation2] sm:$0xff] %vm60, 0.0
    $region21: #{tpu_custom_call.1} parent=1 // pred_fallthru
      _
    %s62 = sadd.s32 0, 0
    %v63 = vld [vmem:[#allocation3] sm:$0xff]
    %v64 = vld [vmem:[#allocation6] sm:$0xff]
    %v65 = vmul.f32 %v63, %v64
    %vm66 = vcmask 261120
    %v68 = vsel %vm66, %v65, 0
    %70 = vmatpush.msra.mxu0 0.0
    %71 = vmatpush.msra.mxu0 0.0
    %72 = vmatpush.msra.mxu0 0.0
    %73 = vmatpush.msra.mxu0 0.0
    %74 = vmatpush.msra.mxu0 0.0
    %75 = vmatpush.msra.mxu0 0.0
    %76 = vmatpush.msra.mxu0 0.0
    %77 = vmatpush.msra.mxu0 0.0
    %78 = vmatpush.msra.mxu0 0.0
    %79 = vmatpush.msra.mxu0 0.0
    %80 = vmatpush.msra.mxu0 0.0
    %81 = vmatpush.msra.mxu0 0.0
    %82 = vmatpush.msra.mxu0 1.0
    %83 = vmatpush.msra.mxu0 1.0
    %84 = vmatpush.msra.mxu0 1.0
    %85 = vmatpush.msra.mxu0 1.0
    %86 = vmatmul.f32.gmra.mxu0 %v68
    %v87 = vpop.f32.mrf.mxu0
    %v88 = vadd.f32 0.0, %v87
    %89 = vdwg.mxu0
    %v90 = vsub.f32 %v88, 1.0
    %v91 = vmul.f32 %v90, %v90
    %p92 = scmp.lt.s32.totalorder %s62, 0
    // Predicated region
    $region22: #{tpu_custom_call.1} parent=1 // pred_check
      %p93 = pneg %p92
    $region23: #{tpu_custom_call.1} parent=1 // pred_check_branch
      %95 = sbr.rel (%p93) target = $region25
    $region24: #{tpu_custom_call.1} parent=1 // pred_region
      %v96 = vld [vmem:[#allocation2] sm:$0xff]
      %v97 = vadd.f32 %v96, %v91
      %vm98 = vcmask 7168
      %99 = vst.msk [vmem:[#allocation2] sm:$0xff] %vm98, %v97
    $region25: #{tpu_custom_call.1} parent=1 // pred_fallthru
      _
    %p100 = scmp.ge.s32.totalorder %s62, 0
    // Predicated region
    $region26: #{tpu_custom_call.1} parent=1 // pred_check
      %p101 = pneg %p100
    $region27: #{tpu_custom_call.1} parent=1 // pred_check_branch
      %103 = sbr.rel (%p101) target = $region29
    $region28: #{tpu_custom_call.1} parent=1 // pred_region
      %s104 = smul.u32 %s62, 8
      %v105 = vlaneseq
      %v106 = vshrl.u32 %v105, 7
      %v107 = vstv %s104
      %v108 = vadd.s32 %v107, %v106
      %v109 = vld [vmem:[#allocation2] sm:$0xff]
      %vm110 = vcmp.lt.s32.totalorder %v108, 8
      %v111 = vsel %vm110, %v91, 0.0
      %v112 = vadd.f32 %v109, %v111
      %vm113 = vcmask 7168
      %114 = vst.msk [vmem:[#allocation2] sm:$0xff] %vm113, %v112
    $region29: #{tpu_custom_call.1} parent=1 // pred_fallthru
      _
    // Predicated region
    $region30: #{tpu_custom_call.1} parent=1 // pred_check
      %p115 = pneg %p56
    $region31: #{tpu_custom_call.1} parent=1 // pred_check_branch
      %117 = sbr.rel (%p115) target = $region33
    $region32: #{tpu_custom_call.1} parent=1 // pred_region
      %v118 = vld [vmem:[#allocation2] sm:$0xff]
      %vm119 = vcmask 7168
      %v120 = vsel %vm119, %v118, 0.0
      %121 = vadd.xlane.f32.xlu0 %v120
      %v122 = vpop.xlane.xlu0 %121
      %v123 = vrot.slane %v122, 4
      %v124 = vadd.f32 %v122, %v123
      %v125 = vrot.slane %v124, 2
      %v126 = vadd.f32 %v124, %v125
      %v127 = vrot.slane %v126, 1
      %v128 = vadd.f32 %v126, %v127
      %s129 = vtos %v128
      %s130 = smul.f32 %s129, 0.0625
      %v131 = vstv %s130
      %132 = vst [vmem:[#allocation8] sm:$0xff] %v131
    $region33: #{tpu_custom_call.1} parent=1 // pred_fallthru
      _
    // Predicated region
    $region34: #{tpu_custom_call.1} parent=1 // pred_check
      _
    $region35: #{tpu_custom_call.1} parent=1 // pred_check_branch
      %134 = sbr.rel (0) target = $region37
    $region36: #{tpu_custom_call.1} parent=1 // pred_region
      %136 = vsyncadd [#allocation5], 0
      %s138 = sshll.u32 [#allocation8], 4
      %s139 = int_to_ptr.vmem [resolvable:$true] %s138
      %s140 = sshll.u32 %s2, 4
      %s141 = int_to_ptr.hbm [resolvable:$true] %s140
      %143 = dma.vmem_to_hbm [thread:$0]  %s139, 128, %s141, [#allocation5]
    $region37: #{tpu_custom_call.1} parent=1 // pred_fallthru
      _
    // Predicated region
    $region38: #{tpu_custom_call.1} parent=1 // pred_check
      _
    $region39: #{tpu_custom_call.1} parent=1 // pred_check_branch
      %145 = sbr.rel (0) target = $region41
    $region40: #{tpu_custom_call.1} parent=1 // pred_region
      %147 = dma.done [#allocation5], 128
    $region41: #{tpu_custom_call.1} parent=1 // pred_fallthru
      _
    %148 = vsyncpa [#allocation4], 1
    %149 = vsyncpa [#allocation7], 1
    %150 = vsyncpa [#allocation5], 1

</llo_original>
